<compile_context>
chip_gen: v5e
topology: v5e:2x2
jax: 0.10.0
libtpu: 0.0.40
codegen_flags: <defaults>
</compile_context>

<pallas_src>
import functools
import math

import jax
import jax.numpy as jnp
from jax.experimental import pallas as pl
from jax.experimental.pallas import tpu as pltpu

_INV_SQRT2 = 0.7071067811865476
_SQRT_2_OVER_PI = 0.7978845608028654
_MIB = 1024 * 1024


def _gelu_exact(x):
    # torch.nn.GELU() default (approximate='none'): 0.5 * x * (1 + erf(x / sqrt(2)))
    xf = x.astype(jnp.float32)
    return 0.5 * xf * (1.0 + jax.lax.erf(xf * _INV_SQRT2))


def _gelu_tanh(x):
    # torch.nn.GELU(approximate='tanh'); cheaper on v5e (tanh -> EUP slot).
    xf = x.astype(jnp.float32)
    return 0.5 * xf * (1.0 + jnp.tanh(_SQRT_2_OVER_PI * (xf + 0.044715 * xf * xf * xf)))


def _round_up(x, m):
    return ((x + m - 1) // m) * m


def _largest_divisor_tile(total, cap, mult):
    """Largest multiple of `mult` that divides `total` and is <= cap (or None)."""
    c = (min(cap, total) // mult) * mult
    while c >= mult:
        if total % c == 0:
            return c
        c -= mult
    return None


def _tpu_generation():
    """Best-effort (is_v5e, is_v7x, vmem_capacity_bytes)."""
    kind = ""
    try:
        kind = jax.devices()[0].device_kind.lower().replace(" ", "")
    except Exception:
        pass
    is_v7 = "v7" in kind
    is_v5e = ("v5lite" in kind) or ("v5e" in kind)
    try:
        vmem_cap = int(pltpu.get_tpu_info().vmem_capacity_bytes)
    except Exception:
        vmem_cap = (64 if is_v7 else 128) * _MIB
    return is_v5e, is_v7, vmem_cap


# ----------------------------------------------------------------------------
# Kernel bodies
# ----------------------------------------------------------------------------

def _ffn_kernel_resident(x_ref, w1_ref, b1_ref, w2_ref, b2_ref, o_ref, *, gelu_fn):
    """Weights fully VMEM-resident; grid = (row_tiles,).  No accumulator needed."""
    a = jnp.dot(x_ref[...], w1_ref[...], preferred_element_type=jnp.float32)
    a = a + b1_ref[...].astype(jnp.float32)
    g = gelu_fn(a)
    out = jnp.dot(g.astype(w2_ref.dtype), w2_ref[...],
                  preferred_element_type=jnp.float32)
    o_ref[...] = (out + b2_ref[...].astype(jnp.float32)).astype(o_ref.dtype)


def _ffn_kernel_streamed(x_ref, w1_ref, b1_ref, w2_ref, b2_ref, o_ref, acc_ref, *,
                         gelu_fn):
    """Weights streamed tile-by-tile; grid = (row_tiles, hidden_tiles)."""
    h = pl.program_id(1)

    @pl.when(h == 0)
    def _():
        acc_ref[...] = jnp.zeros_like(acc_ref)

    a = jnp.dot(x_ref[...], w1_ref[...], preferred_element_type=jnp.float32)
    a = a + b1_ref[...].astype(jnp.float32)
    g = gelu_fn(a)
    acc_ref[...] += jnp.dot(g.astype(w2_ref.dtype), w2_ref[...],
                            preferred_element_type=jnp.float32)

    @pl.when(h == pl.num_programs(1) - 1)
    def _():
        o_ref[...] = (acc_ref[...] + b2_ref[...].astype(jnp.float32)).astype(o_ref.dtype)


# ----------------------------------------------------------------------------
# Wrapper
# ----------------------------------------------------------------------------

def feedforward(x, w1, b1, w2, b2, *, tile_rows=None, tile_h=None,
                vmem_limit_bytes=None, force_streamed=False,
                approximate_gelu=False):
    """FeedForward forward pass: x[..., D] -> [..., D].

    w1: (D, H), b1: (H,), w2: (H, D), b2: (D,).  Dropout(p=0) is the identity.
    """
    *lead, D = x.shape
    H = w1.shape[1]
    assert w1.shape == (D, H) and w2.shape == (H, D)
    assert b1.shape == (H,) and b2.shape == (D,)

    N = math.prod(lead) if lead else 1
    x2 = x.reshape(N, D)
    b1_2d = b1.reshape(1, H)
    b2_2d = b2.reshape(1, D)

    xbytes = jnp.dtype(x.dtype).itemsize
    wbytes = jnp.dtype(w1.dtype).itemsize

    is_v5e, is_v7, vmem_cap = _tpu_generation()

    if vmem_limit_bytes is None:
        if is_v7 or vmem_cap <= 64 * _MIB:
            vmem_limit_bytes = 40 * _MIB                      # 64 MiB physical on v7x
        else:
            vmem_limit_bytes = min(100 * _MIB, int(vmem_cap * 0.78))
    if tile_rows is None:
        tile_rows = 256 if is_v7 else 512
    if tile_h is None:
        tile_h = 512
    tile_rows = max(16, _round_up(tile_rows, 16))             # bf16: 2 rows / sublane

    # ---- Row tile ------------------------------------------------------------
    if N <= tile_rows:
        tr = N                          # full-array block: no alignment constraint
    else:
        tr = tile_rows
        if is_v7:
            # >= 2 row tiles so the "parallel" axis feeds both TensorCores.
            tr = max(16, min(tr, _round_up(pl.cdiv(N, 2), 16)))
    n_row_tiles = pl.cdiv(N, tr)

    gelu_fn = _gelu_tanh if approximate_gelu else _gelu_exact

    # ---- Weight residency decision --------------------------------------------
    weight_bytes = 2 * D * H * wbytes

    def _resident_need(tr_):
        return (2 * weight_bytes                 # W1+W2, worst-case double buffered
                + 2 * 2 * tr_ * D * xbytes       # x + out tiles, double buffered
                + tr_ * H * 4                    # (tr, H) f32 activation intermediate
                + tr_ * D * 4                    # f32 result before downcast/store
                + 2 * (H + D) * max(wbytes, 4))  # biases

    budget = int(0.85 * vmem_limit_bytes)
    use_resident = (not force_streamed) and _resident_need(tr) <= budget
    if (not force_streamed) and (not use_resident):
        for cand in (256, 128):                  # shrink row tile to win residency
            if cand < tr and _resident_need(cand) <= budget:
                tr = cand
                n_row_tiles = pl.cdiv(N, tr)
                use_resident = True
                break

    # ---- Cost estimate (advisory) ----------------------------------------------
    weight_passes = 1 if use_resident else n_row_tiles
    cost = pl.CostEstimate(
        flops=4 * N * D * H,
        transcendentals=N * H,
        bytes_accessed=(2 * N * D * xbytes
                        + 2 * D * H * wbytes * weight_passes
                        + (H + D) * wbytes),
    )
    compiler_params = pltpu.CompilerParams(
        dimension_semantics=("parallel",) if use_resident else ("parallel", "arbitrary"),
        vmem_limit_bytes=vmem_limit_bytes,
    )

    if use_resident:
        out2 = pl.pallas_call(
            functools.partial(_ffn_kernel_resident, gelu_fn=gelu_fn),
            out_shape=jax.ShapeDtypeStruct((N, D), x.dtype),
            grid_spec=pltpu.PrefetchScalarGridSpec(
                num_scalar_prefetch=0,
                grid=(n_row_tiles,),
                in_specs=[
                    pl.BlockSpec((tr, D), lambda i: (i, 0)),   # x rows
                    pl.BlockSpec((D, H), lambda i: (0, 0)),    # W1 (resident)
                    pl.BlockSpec((1, H), lambda i: (0, 0)),    # b1
                    pl.BlockSpec((H, D), lambda i: (0, 0)),    # W2 (resident)
                    pl.BlockSpec((1, D), lambda i: (0, 0)),    # b2
                ],
                out_specs=pl.BlockSpec((tr, D), lambda i: (i, 0)),
            ),
            compiler_params=compiler_params,
            cost_estimate=cost,
        )(x2, w1, b1_2d, w2, b2_2d)
        return out2.reshape(*lead, D)

    # ---- Streamed-weights fallback ---------------------------------------------
    th_mult = 128 if is_v5e else 256
    th = _largest_divisor_tile(H, tile_h, th_mult)
    if th is None and th_mult != 128:
        th = _largest_divisor_tile(H, tile_h, 128)
    if th is None:
        # Guarded fallback: full-H weight tiles (only for small / odd H).
        th = H
        assert 2 * 2 * D * H * wbytes <= vmem_limit_bytes, (
            "hidden dim has no 128-multiple divisor <= tile_h and full (D,H) "
            "weight tiles do not fit the VMEM budget")

    # Triple-buffer streamed weight tiles where VMEM is plentiful (v5e/v6e).
    w_kwargs = {}
    if (not is_v7) and hasattr(pl, "Buffered"):
        w_kwargs = dict(pipeline_mode=pl.Buffered(3))

    out2 = pl.pallas_call(
        functools.partial(_ffn_kernel_streamed, gelu_fn=gelu_fn),
        out_shape=jax.ShapeDtypeStruct((N, D), x.dtype),
        grid_spec=pltpu.PrefetchScalarGridSpec(
            num_scalar_prefetch=0,
            grid=(n_row_tiles, H // th),
            in_specs=[
                pl.BlockSpec((tr, D), lambda i, h: (i, 0)),              # x rows
                pl.BlockSpec((D, th), lambda i, h: (0, h), **w_kwargs),  # W1 cols
                pl.BlockSpec((1, th), lambda i, h: (0, h)),              # b1 tile
                pl.BlockSpec((th, D), lambda i, h: (h, 0), **w_kwargs),  # W2 rows
                pl.BlockSpec((1, D), lambda i, h: (0, 0)),               # b2
            ],
            out_specs=pl.BlockSpec((tr, D), lambda i, h: (i, 0)),
            scratch_shapes=[pltpu.VMEM((tr, D), jnp.float32)],
        ),
        compiler_params=compiler_params,
        cost_estimate=cost,
    )(x2, w1, b1_2d, w2, b2_2d)
    return out2.reshape(*lead, D)


def feedforward_reference(x, w1, b1, w2, b2):
    xf = x.astype(jnp.float32)
    a = xf @ w1.astype(jnp.float32) + b1.astype(jnp.float32)
    g = _gelu_exact(a)
    out = g @ w2.astype(jnp.float32) + b2.astype(jnp.float32)
    return out.astype(x.dtype)


if __name__ == "__main__":
    DIM, HIDDEN = 128, 256          # lane-dense D (multiple of 128)
    dtype = jnp.bfloat16            # full-rate MXU path on v5e/v6e/v7x

    key = jax.random.PRNGKey(0)
    kx, kw1, kb1, kw2, kb2, kx2 = jax.random.split(key, 6)

    w1 = (jax.random.normal(kw1, (DIM, HIDDEN)) * 0.05).astype(dtype)
    b1 = (jax.random.normal(kb1, (HIDDEN,)) * 0.02).astype(dtype)
    w2 = (jax.random.normal(kw2, (HIDDEN, DIM)) * 0.05).astype(dtype)
    b2 = (jax.random.normal(kb2, (DIM,)) * 0.02).astype(dtype)

    def _check(out, x, what):
        ref = feedforward_reference(x, w1, b1, w2, b2)
        out_f = jnp.asarray(out, jnp.float32)
        ref_f = jnp.asarray(ref, jnp.float32)
        assert out.shape == x.shape, (what, out.shape, x.shape)
        assert jnp.allclose(out_f, ref_f, atol=3e-2, rtol=3e-2), (
            f"{what}: max abs err {jnp.max(jnp.abs(out_f - ref_f))}")

    # 1) Weight-resident path (small ViT-like token batch).
    x = jax.random.normal(kx, (2, 8, DIM)).astype(dtype)
    out = jax.block_until_ready(feedforward(x, w1, b1, w2, b2))
    _check(out, x, "resident path")

    # 2) Streamed-weights fallback path (multi row-tile, multi hidden-tile grid).
    xs = jax.random.normal(kx2, (2, 64, DIM)).astype(dtype)
    out_s = jax.block_until_ready(
        feedforward(xs, w1, b1, w2, b2, force_streamed=True,
                    tile_rows=32, tile_h=128))
    _check(out_s, xs, "streamed path")

    print("KERNEL_OK")
</pallas_src>

<mosaic_0001>
module attributes {stable_mosaic.version = 11 : i64} {
  func.func @_ffn_kernel_resident(%arg0: i32, %arg1: memref<16x128xbf16, #tpu.memory_space<vmem>>, %arg2: memref<128x256xbf16, #tpu.memory_space<vmem>>, %arg3: memref<1x256xbf16, #tpu.memory_space<vmem>>, %arg4: memref<256x128xbf16, #tpu.memory_space<vmem>>, %arg5: memref<1x128xbf16, #tpu.memory_space<vmem>>, %arg6: memref<16x128xbf16, #tpu.memory_space<vmem>>) attributes {dimension_semantics = [#tpu.dimension_semantics<parallel>], iteration_bounds = array<i64: 1>, scalar_prefetch = 0 : i64, scratch_operands = 0 : i64, tpu.core_type = #tpu.core_type<tc>, window_params = [{transform_indices = @transform_0, window_bounds = array<i64: 16, 128>}, {pipeline_mode = #tpu.pipeline_mode<synchronous>, transform_indices = @transform_1, window_bounds = array<i64: 128, 256>}, {pipeline_mode = #tpu.pipeline_mode<synchronous>, transform_indices = @transform_2, window_bounds = array<i64: 1, 256>}, {pipeline_mode = #tpu.pipeline_mode<synchronous>, transform_indices = @transform_3, window_bounds = array<i64: 256, 128>}, {pipeline_mode = #tpu.pipeline_mode<synchronous>, transform_indices = @transform_4, window_bounds = array<i64: 1, 128>}, {transform_indices = @transform_5, window_bounds = array<i64: 16, 128>}]} {
    %c0 = arith.constant 0 : index
    %c0_0 = arith.constant 0 : index
    %0 = vector.load %arg1[%c0, %c0_0] : memref<16x128xbf16, #tpu.memory_space<vmem>>, vector<16x128xbf16>
    %c0_1 = arith.constant 0 : index
    %c0_2 = arith.constant 0 : index
    %1 = vector.load %arg2[%c0_1, %c0_2] : memref<128x256xbf16, #tpu.memory_space<vmem>>, vector<128x256xbf16>
    %cst = arith.constant dense<0.000000e+00> : vector<16x256xf32>
    %2 = tpu.matmul %0, %1, %cst {dimension_numbers = #tpu.dot_dimension_numbers<[1], [0], [0], [1], [0, 0, 1, 1], [], []>} : vector<16x128xbf16>, vector<128x256xbf16>, vector<16x256xf32> -> vector<16x256xf32>
    %c0_3 = arith.constant 0 : index
    %c0_4 = arith.constant 0 : index
    %3 = vector.load %arg3[%c0_3, %c0_4] : memref<1x256xbf16, #tpu.memory_space<vmem>>, vector<1x256xbf16>
    %4 = arith.extf %3 : vector<1x256xbf16> to vector<1x256xf32>
    %5 = vector.broadcast %4 : vector<1x256xf32> to vector<16x256xf32>
    %6 = arith.addf %2, %5 : vector<16x256xf32>
    %cst_5 = arith.constant 5.000000e-01 : f32
    %7 = vector.broadcast %cst_5 : f32 to vector<16x256xf32>
    %8 = arith.mulf %7, %6 : vector<16x256xf32>
    %cst_6 = arith.constant 0.707106769 : f32
    %9 = vector.broadcast %cst_6 : f32 to vector<16x256xf32>
    %10 = arith.mulf %6, %9 : vector<16x256xf32>
    %11 = math.erf %10 : vector<16x256xf32>
    %cst_7 = arith.constant 1.000000e+00 : f32
    %12 = vector.broadcast %cst_7 : f32 to vector<16x256xf32>
    %13 = arith.addf %12, %11 : vector<16x256xf32>
    %14 = arith.mulf %8, %13 : vector<16x256xf32>
    %15 = arith.truncf %14 : vector<16x256xf32> to vector<16x256xbf16>
    %c0_8 = arith.constant 0 : index
    %c0_9 = arith.constant 0 : index
    %16 = vector.load %arg4[%c0_8, %c0_9] : memref<256x128xbf16, #tpu.memory_space<vmem>>, vector<256x128xbf16>
    %cst_10 = arith.constant dense<0.000000e+00> : vector<16x128xf32>
    %17 = tpu.matmul %15, %16, %cst_10 {dimension_numbers = #tpu.dot_dimension_numbers<[1], [0], [0], [1], [0, 0, 1, 1], [], []>} : vector<16x256xbf16>, vector<256x128xbf16>, vector<16x128xf32> -> vector<16x128xf32>
    %c0_11 = arith.constant 0 : index
    %c0_12 = arith.constant 0 : index
    %18 = vector.load %arg5[%c0_11, %c0_12] : memref<1x128xbf16, #tpu.memory_space<vmem>>, vector<1x128xbf16>
    %19 = arith.extf %18 : vector<1x128xbf16> to vector<1x128xf32>
    %20 = vector.broadcast %19 : vector<1x128xf32> to vector<16x128xf32>
    %21 = arith.addf %17, %20 : vector<16x128xf32>
    %22 = arith.truncf %21 : vector<16x128xf32> to vector<16x128xbf16>
    %c0_13 = arith.constant 0 : index
    %c0_14 = arith.constant 0 : index
    %23 = vector.load %arg6[%c0_13, %c0_14] : memref<16x128xbf16, #tpu.memory_space<vmem>>, vector<16x128xbf16>
    tpu.vector_store %arg6[%c0_13, %c0_14], %22 {strides = array<i32>} : memref<16x128xbf16, #tpu.memory_space<vmem>>, vector<16x128xbf16>,
    return
  }
  func.func @transform_0(%arg0: i32) -> (i32, i32) {
    %c0_i32 = arith.constant 0 : i32
    %c0_i32_0 = arith.constant 0 : i32
    return %arg0, %c0_i32 : i32, i32
  }
  func.func @transform_1(%arg0: i32) -> (i32, i32) {
    %c0_i32 = arith.constant 0 : i32
    %c0_i32_0 = arith.constant 0 : i32
    %c0_i32_1 = arith.constant 0 : i32
    return %c0_i32, %c0_i32_0 : i32, i32
  }
  func.func @transform_2(%arg0: i32) -> (i32, i32) {
    %c0_i32 = arith.constant 0 : i32
    %c0_i32_0 = arith.constant 0 : i32
    %c0_i32_1 = arith.constant 0 : i32
    return %c0_i32, %c0_i32_0 : i32, i32
  }
  func.func @transform_3(%arg0: i32) -> (i32, i32) {
    %c0_i32 = arith.constant 0 : i32
    %c0_i32_0 = arith.constant 0 : i32
    %c0_i32_1 = arith.constant 0 : i32
    return %c0_i32, %c0_i32_0 : i32, i32
  }
  func.func @transform_4(%arg0: i32) -> (i32, i32) {
    %c0_i32 = arith.constant 0 : i32
    %c0_i32_0 = arith.constant 0 : i32
    %c0_i32_1 = arith.constant 0 : i32
    return %c0_i32, %c0_i32_0 : i32, i32
  }
  func.func @transform_5(%arg0: i32) -> (i32, i32) {
    %c0_i32 = arith.constant 0 : i32
    %c0_i32_0 = arith.constant 0 : i32
    return %arg0, %c0_i32 : i32, i32
  }
}

</mosaic_0001>

<llo_original>
// kernel: tpu_custom_call.1
$region0: #{tpu_custom_call.1}
  #allocation0 [shape = 'u32[]', space=smem, size = 0x4, offset = 0x4, fixed_abs, tag = 'smem constant byte address 0x4 - core index']
  #allocation1 [shape = 'u32[72,128]{1,0:T(1,128)}', space=vmem, size = 0x9000, scoped, tag = 'internal scratch']
  %s0 = inlined_call_operand.hbm [shape: bf16[16,128], index: 0, kind: input, shape index: {}]
  %s1 = inlined_call_operand.hbm [shape: bf16[128,256], index: 1, kind: input, shape index: {}]
  %s2 = inlined_call_operand.hbm [shape: bf16[1,256], index: 2, kind: input, shape index: {}]
  %s3 = inlined_call_operand.hbm [shape: bf16[256,128], index: 3, kind: input, shape index: {}]
  %s4 = inlined_call_operand.vmem [shape: bf16[1,128], index: 4, kind: input, shape index: {}]
  %s5 = inlined_call_operand.hbm [shape: bf16[16,128], index: 5, kind: output, shape index: {}]
  %s6 = sld [smem:[#allocation0]]
  $region46: #{tpu_custom_call.1} parent=0
    _
  %s8 = ssub.s32 1, %s6
  %s9 = scalar_select 0, %s8, %s6
  $region1: #{tpu_custom_call.1} parent=0
    #allocation2 [shape = 'u8[4096]{0}', space=vmem, size = 0x1000, scoped, tag = 'input window, operand 0, single buffered']
    #allocation3 [shape = 's32[1]{0}', space=sflag, size = 0x4, scoped, tag = 'scoped memory for tpu_custom_call.1']
    #allocation4 [shape = 's32[1]{0}', space=sflag, size = 0x4, scoped, tag = 'scoped memory for tpu_custom_call.1']
    #allocation5 [shape = 'u8[65536]{0}', space=vmem, size = 0x10000, scoped, tag = 'input window, operand 1, single buffered']
    #allocation6 [shape = 's32[1]{0}', space=sflag, size = 0x4, scoped, tag = 'scoped memory for tpu_custom_call.1']
    #allocation7 [shape = 'u8[1024]{0}', space=vmem, size = 0x400, scoped, tag = 'input window, operand 2, single buffered']
    #allocation8 [shape = 'u8[65536]{0}', space=vmem, size = 0x10000, scoped, tag = 'input window, operand 3, single buffered']
    #allocation9 [shape = 's32[1]{0}', space=sflag, size = 0x4, scoped, tag = 'scoped memory for tpu_custom_call.1']
    #allocation10 [shape = 'u8[4096]{0}', space=vmem, size = 0x1000, scoped, tag = 'output window, operand 0, single buffered']
    %10 = vsyncpa [#allocation3], 0
    %11 = vsyncpa [#allocation6], 0
    %12 = vsyncpa [#allocation9], 0
    %13 = vsyncpa [#allocation4], 0
    // Predicated region
    $region2: #{tpu_custom_call.1} parent=1 // pred_check
      _
    $region3: #{tpu_custom_call.1} parent=1 // pred_check_branch
      %15 = sbr.rel (0) target = $region5
    $region4: #{tpu_custom_call.1} parent=1 // pred_region
      %17 = vsyncadd [#allocation3], 0
      %s18 = sshll.u32 %s0, 4
      %s19 = int_to_ptr.hbm [resolvable:$true] %s18
      %s20 = sshll.u32 [#allocation2], 4
      %s21 = int_to_ptr.vmem [resolvable:$true] %s20
      %26 = dma.hbm_to_vmem [thread:$0]  %s19, 128, %s21, [#allocation3], 64, 64, 4
    $region5: #{tpu_custom_call.1} parent=1 // pred_fallthru
      _
    // Predicated region
    $region6: #{tpu_custom_call.1} parent=1 // pred_check
      _
    $region7: #{tpu_custom_call.1} parent=1 // pred_check_branch
      %28 = sbr.rel (0) target = $region9
    $region8: #{tpu_custom_call.1} parent=1 // pred_region
      %30 = vsyncadd [#allocation6], 0
      %s31 = sshll.u32 %s1, 4
      %s32 = int_to_ptr.hbm [resolvable:$true] %s31
      %s33 = sshll.u32 [#allocation5], 4
      %s34 = int_to_ptr.vmem [resolvable:$true] %s33
      %39 = dma.hbm_to_vmem [thread:$0]  %s32, 2048, %s34, [#allocation6], 128, 128, 8
    $region9: #{tpu_custom_call.1} parent=1 // pred_fallthru
      _
    // Predicated region
    $region10: #{tpu_custom_call.1} parent=1 // pred_check
      _
    $region11: #{tpu_custom_call.1} parent=1 // pred_check_branch
      %41 = sbr.rel (0) target = $region13
    $region12: #{tpu_custom_call.1} parent=1 // pred_region
      %43 = vsyncadd [#allocation6], 0
      %s45 = sshll.u32 %s2, 4
      %s46 = int_to_ptr.hbm [resolvable:$true] %s45
      %s47 = sshll.u32 [#allocation7], 4
      %s48 = int_to_ptr.vmem [resolvable:$true] %s47
      %50 = dma.hbm_to_vmem [thread:$0]  %s46, 32, %s48, [#allocation6]
    $region13: #{tpu_custom_call.1} parent=1 // pred_fallthru
      _
    // Predicated region
    $region14: #{tpu_custom_call.1} parent=1 // pred_check
      _
    $region15: #{tpu_custom_call.1} parent=1 // pred_check_branch
      %52 = sbr.rel (0) target = $region17
    $region16: #{tpu_custom_call.1} parent=1 // pred_region
      %54 = vsyncadd [#allocation9], 0
      %s55 = sshll.u32 %s3, 4
      %s56 = int_to_ptr.hbm [resolvable:$true] %s55
      %s57 = sshll.u32 [#allocation8], 4
      %s58 = int_to_ptr.vmem [resolvable:$true] %s57
      %63 = dma.hbm_to_vmem [thread:$0]  %s56, 2048, %s58, [#allocation9], 64, 64, 4
    $region17: #{tpu_custom_call.1} parent=1 // pred_fallthru
      _
    // Predicated region
    $region18: #{tpu_custom_call.1} parent=1 // pred_check
      _
    $region19: #{tpu_custom_call.1} parent=1 // pred_check_branch
      %65 = sbr.rel (0) target = $region21
    $region20: #{tpu_custom_call.1} parent=1 // pred_region
      _
    $region21: #{tpu_custom_call.1} parent=1 // pred_fallthru
      _
    // Predicated region
    $region22: #{tpu_custom_call.1} parent=1 // pred_check
      _
    $region23: #{tpu_custom_call.1} parent=1 // pred_check_branch
      %67 = sbr.rel (0) target = $region25
    $region24: #{tpu_custom_call.1} parent=1 // pred_region
      %69 = dma.done [#allocation3], 128
    $region25: #{tpu_custom_call.1} parent=1 // pred_fallthru
      _
    // Predicated region
    $region26: #{tpu_custom_call.1} parent=1 // pred_check
      _
    $region27: #{tpu_custom_call.1} parent=1 // pred_check_branch
      %71 = sbr.rel (0) target = $region29
    $region28: #{tpu_custom_call.1} parent=1 // pred_region
      %73 = dma.done [#allocation6], 2048
    $region29: #{tpu_custom_call.1} parent=1 // pred_fallthru
      _
    // Predicated region
    $region30: #{tpu_custom_call.1} parent=1 // pred_check
      _
    $region31: #{tpu_custom_call.1} parent=1 // pred_check_branch
      %75 = sbr.rel (0) target = $region33
    $region32: #{tpu_custom_call.1} parent=1 // pred_region
      %77 = dma.done [#allocation6], 32
    $region33: #{tpu_custom_call.1} parent=1 // pred_fallthru
      _
    // Predicated region
    $region34: #{tpu_custom_call.1} parent=1 // pred_check
      _
    $region35: #{tpu_custom_call.1} parent=1 // pred_check_branch
      %79 = sbr.rel (0) target = $region37
    $region36: #{tpu_custom_call.1} parent=1 // pred_region
      %81 = dma.done [#allocation9], 2048
    $region37: #{tpu_custom_call.1} parent=1 // pred_fallthru
      _
    %v82 = vld [vmem:[#allocation2] sm:$0xf]
    %v83 = vld [vmem:[#allocation2 + $0x4] sm:$0xf]
    %v84 = vld [vmem:[#allocation5] sm:$0xff]
    %v85 = vld [vmem:[#allocation5 + $0x8] sm:$0xff]
    %v86 = vld [vmem:[#allocation5 + $0x10] sm:$0xff]
    %v87 = vld [vmem:[#allocation5 + $0x18] sm:$0xff]
    %v88 = vld [vmem:[#allocation5 + $0x20] sm:$0xff]
    %v89 = vld [vmem:[#allocation5 + $0x28] sm:$0xff]
    %v90 = vld [vmem:[#allocation5 + $0x30] sm:$0xff]
    %v91 = vld [vmem:[#allocation5 + $0x38] sm:$0xff]
    %v92 = vld [vmem:[#allocation5 + $0x40] sm:$0xff]
    %v93 = vld [vmem:[#allocation5 + $0x48] sm:$0xff]
    %v94 = vld [vmem:[#allocation5 + $0x50] sm:$0xff]
    %v95 = vld [vmem:[#allocation5 + $0x58] sm:$0xff]
    %v96 = vld [vmem:[#allocation5 + $0x60] sm:$0xff]
    %v97 = vld [vmem:[#allocation5 + $0x68] sm:$0xff]
    %v98 = vld [vmem:[#allocation5 + $0x70] sm:$0xff]
    %v99 = vld [vmem:[#allocation5 + $0x78] sm:$0xff]
    %v100 = vld [vmem:[#allocation7] sm:$0x3]
    %v101 = vunpack.c.l.bf16 %v100
    %v103 = vperm.slane %v101, 0
    %v104 = vperm.slane %v101, 2
    %v107 = vperm.slane %v103, 0
    %v108 = vperm.slane %v104, 0
    %v111 = vunpack.c.l.b16 %v82
    %v112 = vunpack.c.l.b16 %v83
    %v113 = vpack.c.b16 %v112, %v111
    %v131 = vunpack.c.l.b16 %v84
    %v132 = vunpack.c.h.b16 %v84
    %v133 = vunpack.c.l.b16 %v85
    %v134 = vunpack.c.h.b16 %v85
    %v135 = vunpack.c.l.b16 %v86
    %v136 = vunpack.c.h.b16 %v86
    %v137 = vunpack.c.l.b16 %v87
    %v138 = vunpack.c.h.b16 %v87
    %v139 = vunpack.c.l.b16 %v88
    %v140 = vunpack.c.h.b16 %v88
    %v141 = vunpack.c.l.b16 %v89
    %v142 = vunpack.c.h.b16 %v89
    %v143 = vunpack.c.l.b16 %v90
    %v144 = vunpack.c.h.b16 %v90
    %v145 = vunpack.c.l.b16 %v91
    %v146 = vunpack.c.h.b16 %v91
    %v147 = vunpack.c.l.b16 %v92
    %v148 = vunpack.c.h.b16 %v92
    %v149 = vunpack.c.l.b16 %v93
    %v150 = vunpack.c.h.b16 %v93
    %v151 = vunpack.c.l.b16 %v94
    %v152 = vunpack.c.h.b16 %v94
    %v153 = vunpack.c.l.b16 %v95
    %v154 = vunpack.c.h.b16 %v95
    %v155 = vunpack.c.l.b16 %v96
    %v156 = vunpack.c.h.b16 %v96
    %v157 = vunpack.c.l.b16 %v97
    %v158 = vunpack.c.h.b16 %v97
    %v159 = vunpack.c.l.b16 %v98
    %v160 = vunpack.c.h.b16 %v98
    %v161 = vunpack.c.l.b16 %v99
    %v162 = vunpack.c.h.b16 %v99
    %v163 = vpack.c.b16 %v133, %v131
    %v164 = vpack.c.b16 %v134, %v132
    %v165 = vpack.c.b16 %v137, %v135
    %v166 = vpack.c.b16 %v138, %v136
    %v167 = vpack.c.b16 %v141, %v139
    %v168 = vpack.c.b16 %v142, %v140
    %v169 = vpack.c.b16 %v145, %v143
    %v170 = vpack.c.b16 %v146, %v144
    %v171 = vpack.c.b16 %v149, %v147
    %v172 = vpack.c.b16 %v150, %v148
    %v173 = vpack.c.b16 %v153, %v151
    %v174 = vpack.c.b16 %v154, %v152
    %v175 = vpack.c.b16 %v157, %v155
    %v176 = vpack.c.b16 %v158, %v156
    %v177 = vpack.c.b16 %v161, %v159
    %v178 = vpack.c.b16 %v162, %v160
    %195 = vmatpush.bf16.msra.mxu0 %v177
    %196 = vmatpush.bf16.msra.mxu0 %v175
    %197 = vmatpush.bf16.msra.mxu0 %v173
    %198 = vmatpush.bf16.msra.mxu0 %v171
    %199 = vmatpush.bf16.msra.mxu0 %v169
    %200 = vmatpush.bf16.msra.mxu0 %v167
    %201 = vmatpush.bf16.msra.mxu0 %v165
    %202 = vmatpush.bf16.msra.mxu0 %v163
    %203 = vmatmul.bf16.gmra.mxu0 %v113
    %v204 = vpop.f32.mrf.mxu0
    %v205 = vadd.f32 %v107, %v204
    %v206 = vpop.f32.mrf.mxu0
    %v207 = vadd.f32 %v107, %v206
    %208 = vdwg.mxu0
    %209 = vmatpush.bf16.msra.mxu0 %v178
    %210 = vmatpush.bf16.msra.mxu0 %v176
    %211 = vmatpush.bf16.msra.mxu0 %v174
    %212 = vmatpush.bf16.msra.mxu0 %v172
    %213 = vmatpush.bf16.msra.mxu0 %v170
    %214 = vmatpush.bf16.msra.mxu0 %v168
    %215 = vmatpush.bf16.msra.mxu0 %v166
    %216 = vmatpush.bf16.msra.mxu0 %v164
    %217 = vmatmul.bf16.gmra.mxu0 %v113
    %v218 = vpop.f32.mrf.mxu0
    %v219 = vadd.f32 %v108, %v218
    %v220 = vpop.f32.mrf.mxu0
    %v221 = vadd.f32 %v108, %v220
    %222 = vdwg.mxu0
    %v223 = vmul.f32 %v205, 0.5
    %v224 = vmul.f32 %v219, 0.5
    %v225 = vmul.f32 %v207, 0.5
    %v226 = vmul.f32 %v221, 0.5
    %v227 = vmul.f32 %v205, 0.70710677
    %v228 = vmul.f32 %v219, 0.70710677
    %v229 = vmul.f32 %v207, 0.70710677
    %v230 = vmul.f32 %v221, 0.70710677
    %v231 = vmul.f32 %v227, %v227
    %v232 = vmin.f32 16.0, %v231
    %v233 = vmul.f32 %v232, 2.1237322e-06
    %v234 = vadd.f32 %v233, 0.00028619796
    %v235 = vmul.f32 %v232, %v234
    %v236 = vadd.f32 %v235, 0.0036580483
    %v237 = vmul.f32 %v232, %v236
    %v238 = vadd.f32 %v237, 0.05243302
    %v239 = vmul.f32 %v232, %v238
    %v240 = vadd.f32 %v239, 0.18741608
    %v241 = vmul.f32 %v232, %v240
    %v242 = vadd.f32 %v241, 1.1283791
    %v243 = vmul.f32 %v227, %v242
    %v244 = vmul.f32 %v232, 3.8918573e-05
    %v245 = vadd.f32 %v244, 0.001143296
    %v246 = vmul.f32 %v232, %v245
    %v247 = vadd.f32 %v246, 0.014752088
    %v248 = vmul.f32 %v232, %v247
    %v249 = vadd.f32 %v248, 0.112945676
    %v250 = vmul.f32 %v232, %v249
    %v251 = vadd.f32 %v250, 0.4994258
    %v252 = vmul.f32 %v232, %v251
    %v253 = vadd.f32 %v252, 1.0
    %v254 = vrcp.pop %v253
    %v255 = vmul.f32 %v253, %v254
    %v256 = vsub.f32 1.0, %v255
    %v257 = vmul.f32 %v254, %v256
    %v258 = vadd.f32 %v254, %v257
    %vm259 = vweird.f32 %v253
    %vm260 = vweird.f32 %v254
    %vm261 = vmor %vm259, %vm260
    %v262 = vsel %vm261, %v254, %v258
    %v263 = vand.u32 2147483647, %v253
    %vm264 = vcmp.eq.f32.partialorder %v263, 8.507059e+37
    %v265 = vand.u32 %v253, 2147483648
    %v266 = vor.u32 1.1754944e-38, %v265
    %v267 = vsel %vm264, %v266, %v262
    %v268 = vmul.f32 %v243, %v267
    %v269 = vmin.f32 %v268, 1.0
    %v270 = vmax.f32 %v269, -1.0
    %v271 = vmul.f32 %v228, %v228
    %v272 = vmin.f32 16.0, %v271
    %v273 = vmul.f32 %v272, 2.1237322e-06
    %v274 = vadd.f32 %v273, 0.00028619796
    %v275 = vmul.f32 %v272, %v274
    %v276 = vadd.f32 %v275, 0.0036580483
    %v277 = vmul.f32 %v272, %v276
    %v278 = vadd.f32 %v277, 0.05243302
    %v279 = vmul.f32 %v272, %v278
    %v280 = vadd.f32 %v279, 0.18741608
    %v281 = vmul.f32 %v272, %v280
    %v282 = vadd.f32 %v281, 1.1283791
    %v283 = vmul.f32 %v228, %v282
    %v284 = vmul.f32 %v272, 3.8918573e-05
    %v285 = vadd.f32 %v284, 0.001143296
    %v286 = vmul.f32 %v272, %v285
    %v287 = vadd.f32 %v286, 0.014752088
    %v288 = vmul.f32 %v272, %v287
    %v289 = vadd.f32 %v288, 0.112945676
    %v290 = vmul.f32 %v272, %v289
    %v291 = vadd.f32 %v290, 0.4994258
    %v292 = vmul.f32 %v272, %v291
    %v293 = vadd.f32 %v292, 1.0
    %v294 = vrcp.pop %v293
    %v295 = vmul.f32 %v293, %v294
    %v296 = vsub.f32 1.0, %v295
    %v297 = vmul.f32 %v294, %v296
    %v298 = vadd.f32 %v294, %v297
    %vm299 = vweird.f32 %v293
    %vm300 = vweird.f32 %v294
    %vm301 = vmor %vm299, %vm300
    %v302 = vsel %vm301, %v294, %v298
    %v303 = vand.u32 2147483647, %v293
    %vm304 = vcmp.eq.f32.partialorder %v303, 8.507059e+37
    %v305 = vand.u32 %v293, 2147483648
    %v306 = vor.u32 1.1754944e-38, %v305
    %v307 = vsel %vm304, %v306, %v302
    %v308 = vmul.f32 %v283, %v307
    %v309 = vmin.f32 %v308, 1.0
    %v310 = vmax.f32 %v309, -1.0
    %v311 = vmul.f32 %v229, %v229
    %v312 = vmin.f32 16.0, %v311
    %v313 = vmul.f32 %v312, 2.1237322e-06
    %v314 = vadd.f32 %v313, 0.00028619796
    %v315 = vmul.f32 %v312, %v314
    %v316 = vadd.f32 %v315, 0.0036580483
    %v317 = vmul.f32 %v312, %v316
    %v318 = vadd.f32 %v317, 0.05243302
    %v319 = vmul.f32 %v312, %v318
    %v320 = vadd.f32 %v319, 0.18741608
    %v321 = vmul.f32 %v312, %v320
    %v322 = vadd.f32 %v321, 1.1283791
    %v323 = vmul.f32 %v229, %v322
    %v324 = vmul.f32 %v312, 3.8918573e-05
    %v325 = vadd.f32 %v324, 0.001143296
    %v326 = vmul.f32 %v312, %v325
    %v327 = vadd.f32 %v326, 0.014752088
    %v328 = vmul.f32 %v312, %v327
    %v329 = vadd.f32 %v328, 0.112945676
    %v330 = vmul.f32 %v312, %v329
    %v331 = vadd.f32 %v330, 0.4994258
    %v332 = vmul.f32 %v312, %v331
    %v333 = vadd.f32 %v332, 1.0
    %v334 = vrcp.pop %v333
    %v335 = vmul.f32 %v333, %v334
    %v336 = vsub.f32 1.0, %v335
    %v337 = vmul.f32 %v334, %v336
    %v338 = vadd.f32 %v334, %v337
    %vm339 = vweird.f32 %v333
    %vm340 = vweird.f32 %v334
    %vm341 = vmor %vm339, %vm340
    %v342 = vsel %vm341, %v334, %v338
    %v343 = vand.u32 2147483647, %v333
    %vm344 = vcmp.eq.f32.partialorder %v343, 8.507059e+37
    %v345 = vand.u32 %v333, 2147483648
    %v346 = vor.u32 1.1754944e-38, %v345
    %v347 = vsel %vm344, %v346, %v342
    %v348 = vmul.f32 %v323, %v347
    %v349 = vmin.f32 %v348, 1.0
    %v350 = vmax.f32 %v349, -1.0
    %v351 = vmul.f32 %v230, %v230
    %v352 = vmin.f32 16.0, %v351
    %v353 = vmul.f32 %v352, 2.1237322e-06
    %v354 = vadd.f32 %v353, 0.00028619796
    %v355 = vmul.f32 %v352, %v354
    %v356 = vadd.f32 %v355, 0.0036580483
    %v357 = vmul.f32 %v352, %v356
    %v358 = vadd.f32 %v357, 0.05243302
    %v359 = vmul.f32 %v352, %v358
    %v360 = vadd.f32 %v359, 0.18741608
    %v361 = vmul.f32 %v352, %v360
    %v362 = vadd.f32 %v361, 1.1283791
    %v363 = vmul.f32 %v230, %v362
    %v364 = vmul.f32 %v352, 3.8918573e-05
    %v365 = vadd.f32 %v364, 0.001143296
    %v366 = vmul.f32 %v352, %v365
    %v367 = vadd.f32 %v366, 0.014752088
    %v368 = vmul.f32 %v352, %v367
    %v369 = vadd.f32 %v368, 0.112945676
    %v370 = vmul.f32 %v352, %v369
    %v371 = vadd.f32 %v370, 0.4994258
    %v372 = vmul.f32 %v352, %v371
    %v373 = vadd.f32 %v372, 1.0
    %v374 = vrcp.pop %v373
    %v375 = vmul.f32 %v373, %v374
    %v376 = vsub.f32 1.0, %v375
    %v377 = vmul.f32 %v374, %v376
    %v378 = vadd.f32 %v374, %v377
    %vm379 = vweird.f32 %v373
    %vm380 = vweird.f32 %v374
    %vm381 = vmor %vm379, %vm380
    %v382 = vsel %vm381, %v374, %v378
    %v383 = vand.u32 2147483647, %v373
    %vm384 = vcmp.eq.f32.partialorder %v383, 8.507059e+37
    %v385 = vand.u32 %v373, 2147483648
    %v386 = vor.u32 1.1754944e-38, %v385
    %v387 = vsel %vm384, %v386, %v382
    %v388 = vmul.f32 %v363, %v387
    %v389 = vmin.f32 %v388, 1.0
    %v390 = vmax.f32 %v389, -1.0
    %v391 = vadd.f32 %v270, 1.0
    %v392 = vadd.f32 %v310, 1.0
    %v393 = vadd.f32 %v350, 1.0
    %v394 = vadd.f32 %v390, 1.0
    %v395 = vmul.f32 %v223, %v391
    %v396 = vmul.f32 %v224, %v392
    %v397 = vmul.f32 %v225, %v393
    %v398 = vmul.f32 %v226, %v394
    %v399 = vpack.c.bf16 %v397, %v395
    %v400 = vpack.c.bf16 %v398, %v396
    %v401 = vld [vmem:[#allocation8] sm:$0xf]
    %v402 = vld [vmem:[#allocation8 + $0x4] sm:$0xf]
    %v403 = vld [vmem:[#allocation8 + $0x8] sm:$0xf]
    %v404 = vld [vmem:[#allocation8 + $0xc] sm:$0xf]
    %v405 = vld [vmem:[#allocation8 + $0x10] sm:$0xf]
    %v406 = vld [vmem:[#allocation8 + $0x14] sm:$0xf]
    %v407 = vld [vmem:[#allocation8 + $0x18] sm:$0xf]
    %v408 = vld [vmem:[#allocation8 + $0x1c] sm:$0xf]
    %v409 = vld [vmem:[#allocation8 + $0x20] sm:$0xf]
    %v410 = vld [vmem:[#allocation8 + $0x24] sm:$0xf]
    %v411 = vld [vmem:[#allocation8 + $0x28] sm:$0xf]
    %v412 = vld [vmem:[#allocation8 + $0x2c] sm:$0xf]
    %v413 = vld [vmem:[#allocation8 + $0x30] sm:$0xf]
    %v414 = vld [vmem:[#allocation8 + $0x34] sm:$0xf]
    %v415 = vld [vmem:[#allocation8 + $0x38] sm:$0xf]
    %v416 = vld [vmem:[#allocation8 + $0x3c] sm:$0xf]
    %v417 = vld [vmem:[#allocation8 + $0x40] sm:$0xf]
    %v418 = vld [vmem:[#allocation8 + $0x44] sm:$0xf]
    %v419 = vld [vmem:[#allocation8 + $0x48] sm:$0xf]
    %v420 = vld [vmem:[#allocation8 + $0x4c] sm:$0xf]
    %v421 = vld [vmem:[#allocation8 + $0x50] sm:$0xf]
    %v422 = vld [vmem:[#allocation8 + $0x54] sm:$0xf]
    %v423 = vld [vmem:[#allocation8 + $0x58] sm:$0xf]
    %v424 = vld [vmem:[#allocation8 + $0x5c] sm:$0xf]
    %v425 = vld [vmem:[#allocation8 + $0x60] sm:$0xf]
    %v426 = vld [vmem:[#allocation8 + $0x64] sm:$0xf]
    %v427 = vld [vmem:[#allocation8 + $0x68] sm:$0xf]
    %v428 = vld [vmem:[#allocation8 + $0x6c] sm:$0xf]
    %v429 = vld [vmem:[#allocation8 + $0x70] sm:$0xf]
    %v430 = vld [vmem:[#allocation8 + $0x74] sm:$0xf]
    %v431 = vld [vmem:[#allocation8 + $0x78] sm:$0xf]
    %v432 = vld [vmem:[#allocation8 + $0x7c] sm:$0xf]
    %v433 = vld [vmem:[%s4] sm:$0x1]
    %v434 = vunpack.c.l.bf16 %v433
    %v435 = vperm.slane %v434, 0
    %v468 = vunpack.c.l.b16 %v401
    %v469 = vunpack.c.l.b16 %v402
    %v470 = vunpack.c.l.b16 %v403
    %v471 = vunpack.c.l.b16 %v404
    %v472 = vunpack.c.l.b16 %v405
    %v473 = vunpack.c.l.b16 %v406
    %v474 = vunpack.c.l.b16 %v407
    %v475 = vunpack.c.l.b16 %v408
    %v476 = vunpack.c.l.b16 %v409
    %v477 = vunpack.c.l.b16 %v410
    %v478 = vunpack.c.l.b16 %v411
    %v479 = vunpack.c.l.b16 %v412
    %v480 = vunpack.c.l.b16 %v413
    %v481 = vunpack.c.l.b16 %v414
    %v482 = vunpack.c.l.b16 %v415
    %v483 = vunpack.c.l.b16 %v416
    %v484 = vunpack.c.l.b16 %v417
    %v485 = vunpack.c.l.b16 %v418
    %v486 = vunpack.c.l.b16 %v419
    %v487 = vunpack.c.l.b16 %v420
    %v488 = vunpack.c.l.b16 %v421
    %v489 = vunpack.c.l.b16 %v422
    %v490 = vunpack.c.l.b16 %v423
    %v491 = vunpack.c.l.b16 %v424
    %v492 = vunpack.c.l.b16 %v425
    %v493 = vunpack.c.l.b16 %v426
    %v494 = vunpack.c.l.b16 %v427
    %v495 = vunpack.c.l.b16 %v428
    %v496 = vunpack.c.l.b16 %v429
    %v497 = vunpack.c.l.b16 %v430
    %v498 = vunpack.c.l.b16 %v431
    %v499 = vunpack.c.l.b16 %v432
    %v500 = vpack.c.b16 %v469, %v468
    %v501 = vpack.c.b16 %v471, %v470
    %v502 = vpack.c.b16 %v473, %v472
    %v503 = vpack.c.b16 %v475, %v474
    %v504 = vpack.c.b16 %v477, %v476
    %v505 = vpack.c.b16 %v479, %v478
    %v506 = vpack.c.b16 %v481, %v480
    %v507 = vpack.c.b16 %v483, %v482
    %v508 = vpack.c.b16 %v485, %v484
    %v509 = vpack.c.b16 %v487, %v486
    %v510 = vpack.c.b16 %v489, %v488
    %v511 = vpack.c.b16 %v491, %v490
    %v512 = vpack.c.b16 %v493, %v492
    %v513 = vpack.c.b16 %v495, %v494
    %v514 = vpack.c.b16 %v497, %v496
    %v515 = vpack.c.b16 %v499, %v498
    %532 = vmatpush.bf16.msra.mxu0 %v507
    %533 = vmatpush.bf16.msra.mxu0 %v506
    %534 = vmatpush.bf16.msra.mxu0 %v505
    %535 = vmatpush.bf16.msra.mxu0 %v504
    %536 = vmatpush.bf16.msra.mxu0 %v503
    %537 = vmatpush.bf16.msra.mxu0 %v502
    %538 = vmatpush.bf16.msra.mxu0 %v501
    %539 = vmatpush.bf16.msra.mxu0 %v500
    %540 = vmatmul.bf16.gmra.mxu0 %v399
    %v541 = vpop.f32.mrf.mxu0
    %v542 = vadd.f32 %v435, %v541
    %v543 = vpop.f32.mrf.mxu0
    %v544 = vadd.f32 %v435, %v543
    %545 = vdwg.mxu0
    %546 = vmatpush.bf16.msra.mxu0 %v515
    %547 = vmatpush.bf16.msra.mxu0 %v514
    %548 = vmatpush.bf16.msra.mxu0 %v513
    %549 = vmatpush.bf16.msra.mxu0 %v512
    %550 = vmatpush.bf16.msra.mxu0 %v511
    %551 = vmatpush.bf16.msra.mxu0 %v510
    %552 = vmatpush.bf16.msra.mxu0 %v509
    %553 = vmatpush.bf16.msra.mxu0 %v508
    %554 = vmatmul.bf16.gmra.mxu0 %v400
    %v555 = vpop.f32.mrf.mxu0
    %v556 = vadd.f32 %v542, %v555
    %v557 = vpop.f32.mrf.mxu0
    %v558 = vadd.f32 %v544, %v557
    %559 = vdwg.mxu0
    %v560 = vpack.c.bf16 %v556, %v556
    %v561 = vpack.c.bf16 %v558, %v558
    %562 = vst [vmem:[#allocation10] sm:$0xf] %v560
    %563 = vst [vmem:[#allocation10 + $0x4] sm:$0xf] %v561
    // Predicated region
    $region38: #{tpu_custom_call.1} parent=1 // pred_check
      _
    $region39: #{tpu_custom_call.1} parent=1 // pred_check_branch
      %565 = sbr.rel (0) target = $region41
    $region40: #{tpu_custom_call.1} parent=1 // pred_region
      %567 = vsyncadd [#allocation4], 0
      %s568 = sshll.u32 [#allocation10], 4
      %s569 = int_to_ptr.vmem [resolvable:$true] %s568
      %s570 = sshll.u32 %s5, 4
      %s571 = int_to_ptr.hbm [resolvable:$true] %s570
      %576 = dma.vmem_to_hbm [thread:$0]  %s569, 128, %s571, [#allocation4], 64, 64, 4
    $region41: #{tpu_custom_call.1} parent=1 // pred_fallthru
      _
    // Predicated region
    $region42: #{tpu_custom_call.1} parent=1 // pred_check
      _
    $region43: #{tpu_custom_call.1} parent=1 // pred_check_branch
      %578 = sbr.rel (0) target = $region45
    $region44: #{tpu_custom_call.1} parent=1 // pred_region
      %580 = dma.done [#allocation4], 128
    $region45: #{tpu_custom_call.1} parent=1 // pred_fallthru
      _
    %581 = vsyncpa [#allocation3], 1
    %582 = vsyncpa [#allocation6], 1
    %583 = vsyncpa [#allocation9], 1
    %584 = vsyncpa [#allocation4], 1

</llo_original>
